<compile_context>
chip_gen: v7x
topology: tpu7x:2x2x1
jax: 0.10.0
libtpu: 0.0.40
codegen_flags: <defaults>
</compile_context>

<pallas_src>
import jax
import jax.numpy as jnp
from jax.experimental import pallas as pl
from jax.experimental.pallas import tpu as pltpu


# ---------------------------------------------------------------------------
# Kernel
# ---------------------------------------------------------------------------
def idblock_kernel(x_ref, w_ref, b_ref, o_ref, g_ref):
    """Fused SiLU-gate + Linear: o = (silu(x) * x) @ W^T + b.

    w_ref holds the pre-transposed weight W^T with layout [in, out], so the
    matmul below is a straight MXU push with no in-kernel transpose.
    """
    # Gate computed once per row tile (inner grid axis n == 0), reused for all
    # output-column tiles.  Elementwise math in f32, stored bf16.
    # NOTE: relies on the n axis being innermost and sequential ("arbitrary").
    @pl.when(pl.program_id(1) == 0)
    def _():
        x = x_ref[...].astype(jnp.float32)
        g_ref[...] = (x * jax.nn.sigmoid(x) * x).astype(jnp.bfloat16)

    # bf16 x bf16 -> f32 accumulate on the MXU.
    y = jnp.dot(g_ref[...], w_ref[...], preferred_element_type=jnp.float32)
    o_ref[...] = (y + b_ref[...]).astype(o_ref.dtype)


# ---------------------------------------------------------------------------
# Tiling / VMEM planning helpers
# ---------------------------------------------------------------------------
def _round_up(x, m):
    return (x + m - 1) // m * m


def _default_vmem_budget():
    """~80% of physical VMEM, minus headroom for compiler-internal scratch.

    v5e/v6e (128 MiB) -> ~102 MiB; v7x (64 MiB) -> ~51 MiB; unknown -> 48 MiB.
    """
    try:
        cap = int(pltpu.get_tpu_info().vmem_capacity_bytes)
        return max(32 * 1024 * 1024,
                   min(int(cap * 0.8), cap - 12 * 1024 * 1024))
    except Exception:  # hardware query unavailable -> conservative default
        return 48 * 1024 * 1024


def _pick_tile_n(H, requested=None):
    """Largest multiple of 128 dividing H (<= 512); H itself only for tiny H."""
    if requested is not None and requested % 128 == 0 and H % requested == 0:
        return requested
    if H % 128 != 0:
        return H  # small/awkward hidden size (e.g. the smoke test's H=32)
    for cand in (512, 384, 256, 128):
        if H % cand == 0:
            return cand
    return 128


def _pick_tile_m(M, H, tile_n, x_bytes, out_bytes, budget, requested=None):
    """Largest row tile (multiple of 16, capped at round_up(M,16)) fitting VMEM."""
    m_cap = _round_up(max(M, 1), 16)
    if requested is not None:
        return min(_round_up(max(int(requested), 16), 16), m_cap)
    w_bytes = 2 * H * tile_n * 2              # double-buffered bf16 weight slab
    for cand in (1024, 512, 256, 128, 64, 32, 16):
        tm = min(cand, m_cap)
        need = (2 * tm * H * x_bytes          # activations, double-buffered
                + tm * H * 2                  # bf16 gate scratch
                + w_bytes
                + 2 * tm * tile_n * out_bytes  # output, double-buffered
                + 2 * 4 * tile_n              # bias
                + (2 << 20))                  # slack for internal scratch
        if need <= budget:
            return tm
    return min(16, m_cap)


# ---------------------------------------------------------------------------
# Parameter prep (do ONCE at load time, not per forward call)
# ---------------------------------------------------------------------------
def prepare_idblock_params(w, b):
    """PyTorch nn.Linear weight [out, in] -> persisted bf16 W^T [in, out];
    bias -> f32 [1, H].  Avoids a per-call cast/transpose over 4*H^2 bytes."""
    w_t = jnp.asarray(w).T.astype(jnp.bfloat16)
    b2d = jnp.asarray(b).reshape(1, -1).astype(jnp.float32)
    return w_t, b2d


# ---------------------------------------------------------------------------
# Forward wrapper
# ---------------------------------------------------------------------------
def idblock_forward(states, attention_mask, w_t, b2d, res_scale=1, *,
                    tile_m=None, tile_n=None, stream_activations_bf16=None,
                    out_dtype=None, vmem_budget=None):
    """states: [B, S, H]; w_t: bf16 [H_in, H_out] (pre-transposed); b2d: f32 [1, H]."""
    del attention_mask, res_scale  # consumed only by the external sub-block (identity here)
    B, S, H = states.shape
    M = B * S
    out_dtype = states.dtype if out_dtype is None else out_dtype

    budget = _default_vmem_budget() if vmem_budget is None else int(vmem_budget)

    # Stream activations in bf16 when VMEM is v7x-sized so large row tiles fit.
    if stream_activations_bf16 is None:
        stream_activations_bf16 = (jnp.dtype(states.dtype).itemsize > 2
                                   and budget < 72 * 1024 * 1024)

    x2d = states.reshape(M, H)
    if stream_activations_bf16:
        x2d = x2d.astype(jnp.bfloat16)

    x_bytes = jnp.dtype(x2d.dtype).itemsize
    o_bytes = jnp.dtype(out_dtype).itemsize
    tn = _pick_tile_n(H, tile_n)
    tm = _pick_tile_m(M, H, tn, x_bytes, o_bytes, budget, tile_m)

    grid = (pl.cdiv(M, tm), pl.cdiv(H, tn))  # ragged last row tile handled by Pallas

    out = pl.pallas_call(
        idblock_kernel,
        out_shape=jax.ShapeDtypeStruct((M, H), out_dtype),
        grid_spec=pltpu.PrefetchScalarGridSpec(
            num_scalar_prefetch=0,
            grid=grid,
            in_specs=[
                pl.BlockSpec((tm, H), lambda i, n: (i, 0)),    # activation rows
                pl.BlockSpec((H, tn), lambda i, n: (0, n)),    # bf16 W^T slab [in, out]
                pl.BlockSpec((1, tn), lambda i, n: (0, n)),    # bias slab
            ],
            out_specs=pl.BlockSpec((tm, tn), lambda i, n: (i, n)),
            scratch_shapes=[pltpu.VMEM((tm, H), jnp.bfloat16)],  # gated rows
        ),
        compiler_params=pltpu.CompilerParams(
            # Row tiles are independent (megacore-shardable); the inner axis
            # carries the gate scratch across iterations -> keep it sequential.
            dimension_semantics=("parallel", "arbitrary"),
            vmem_limit_bytes=int(budget),
        ),
    )(x2d, w_t, b2d)

    return out.reshape(B, S, H)


# ---------------------------------------------------------------------------
# Pure-JAX reference (same math: bf16 gated activations, f32 accumulate)
# ---------------------------------------------------------------------------
def idblock_reference(states, w, b):
    x = states.astype(jnp.float32)
    gated = (x * jax.nn.sigmoid(x) * x).astype(jnp.bfloat16)
    y = jnp.einsum("bsh,oh->bso", gated, w.astype(jnp.bfloat16),
                   preferred_element_type=jnp.float32)
    return (y + b.astype(jnp.float32)).astype(states.dtype)


if __name__ == "__main__":
    key = jax.random.PRNGKey(0)
    k_x, k_w, k_b, k_x2, k_w2, k_b2 = jax.random.split(key, 6)

    # --- Test 1: small module-consistent shapes, auto-tuned tiles ---
    B, S, H = 2, 8, 32
    states = jax.random.normal(k_x, (B, S, H), dtype=jnp.float32)
    attention_mask = jnp.ones((B, S), dtype=jnp.float32)
    w = jax.random.normal(k_w, (H, H), dtype=jnp.float32) * 0.02   # PyTorch [out, in]
    b = jax.random.normal(k_b, (H,), dtype=jnp.float32) * 0.02

    w_t, b2d = prepare_idblock_params(w, b)          # one-time weight prep
    out = idblock_forward(states, attention_mask, w_t, b2d)
    out = jax.block_until_ready(out)
    ref = idblock_reference(states, w, b)
    assert out.shape == (B, S, H)
    assert out.dtype == states.dtype
    assert jnp.allclose(out, ref, atol=1e-2, rtol=1e-2), "mismatch vs reference (test 1)"

    # --- Test 2: multi-tile grid in both axes + ragged last row tile (M=40) ---
    B2, S2, H2 = 2, 20, 256
    states2 = jax.random.normal(k_x2, (B2, S2, H2), dtype=jnp.float32)
    mask2 = jnp.ones((B2, S2), dtype=jnp.float32)
    w2 = jax.random.normal(k_w2, (H2, H2), dtype=jnp.float32) * 0.02
    b2 = jax.random.normal(k_b2, (H2,), dtype=jnp.float32) * 0.02

    w2_t, b2_2d = prepare_idblock_params(w2, b2)
    out2 = idblock_forward(states2, mask2, w2_t, b2_2d, tile_m=16, tile_n=128)
    out2 = jax.block_until_ready(out2)
    ref2 = idblock_reference(states2, w2, b2)
    assert out2.shape == (B2, S2, H2)
    assert jnp.allclose(out2, ref2, atol=1e-2, rtol=1e-2), "mismatch vs reference (test 2)"

    print("KERNEL_OK")
</pallas_src>

<mosaic_0001>
module attributes {stable_mosaic.version = 11 : i64} {
  func.func @idblock_kernel(%arg0: i32, %arg1: i32, %arg2: memref<16x32xbf16, #tpu.memory_space<vmem>>, %arg3: memref<32x32xbf16, #tpu.memory_space<vmem>>, %arg4: memref<1x32xf32, #tpu.memory_space<vmem>>, %arg5: memref<16x32xf32, #tpu.memory_space<vmem>>, %arg6: memref<16x32xbf16, #tpu.memory_space<vmem>>) attributes {dimension_semantics = [#tpu.dimension_semantics<parallel>, #tpu.dimension_semantics<arbitrary>], iteration_bounds = array<i64: 1, 1>, scalar_prefetch = 0 : i64, scratch_operands = 1 : i64, tpu.core_type = #tpu.core_type<tc>, window_params = [{transform_indices = @transform_0, window_bounds = array<i64: 16, 32>}, {transform_indices = @transform_1, window_bounds = array<i64: 32, 32>}, {transform_indices = @transform_2, window_bounds = array<i64: 1, 32>}, {transform_indices = @transform_3, window_bounds = array<i64: 16, 32>}]} {
    %c0_i32 = arith.constant 0 : i32
    %0 = arith.cmpi eq, %arg1, %c0_i32 : i32
    %1 = arith.extui %0 : i1 to i32
    %c0_i32_0 = arith.constant 0 : i32
    %2 = arith.cmpi ne, %1, %c0_i32_0 : i32
    scf.if %2 {
      %c0_8 = arith.constant 0 : index
      %c0_9 = arith.constant 0 : index
      %10 = vector.load %arg2[%c0_8, %c0_9] : memref<16x32xbf16, #tpu.memory_space<vmem>>, vector<16x32xbf16>
      %11 = arith.extf %10 : vector<16x32xbf16> to vector<16x32xf32>
      %12 = arith.negf %11 : vector<16x32xf32>
      %13 = math.exp %12 : vector<16x32xf32>
      %cst_10 = arith.constant 1.000000e+00 : f32
      %14 = vector.broadcast %cst_10 : f32 to vector<16x32xf32>
      %15 = arith.addf %14, %13 : vector<16x32xf32>
      %16 = arith.divf %14, %15 : vector<16x32xf32>
      %17 = arith.mulf %11, %16 : vector<16x32xf32>
      %18 = arith.mulf %17, %11 : vector<16x32xf32>
      %19 = arith.truncf %18 : vector<16x32xf32> to vector<16x32xbf16>
      %c0_11 = arith.constant 0 : index
      %c0_12 = arith.constant 0 : index
      %20 = vector.load %arg6[%c0_11, %c0_12] : memref<16x32xbf16, #tpu.memory_space<vmem>>, vector<16x32xbf16>
      tpu.vector_store %arg6[%c0_11, %c0_12], %19 {strides = array<i32>} : memref<16x32xbf16, #tpu.memory_space<vmem>>, vector<16x32xbf16>,
    } else {
    }
    %c0 = arith.constant 0 : index
    %c0_1 = arith.constant 0 : index
    %3 = vector.load %arg6[%c0, %c0_1] : memref<16x32xbf16, #tpu.memory_space<vmem>>, vector<16x32xbf16>
    %c0_2 = arith.constant 0 : index
    %c0_3 = arith.constant 0 : index
    %4 = vector.load %arg3[%c0_2, %c0_3] : memref<32x32xbf16, #tpu.memory_space<vmem>>, vector<32x32xbf16>
    %cst = arith.constant dense<0.000000e+00> : vector<16x32xf32>
    %5 = tpu.matmul %3, %4, %cst {dimension_numbers = #tpu.dot_dimension_numbers<[1], [0], [0], [1], [0, 0, 1, 1], [], []>} : vector<16x32xbf16>, vector<32x32xbf16>, vector<16x32xf32> -> vector<16x32xf32>
    %c0_4 = arith.constant 0 : index
    %c0_5 = arith.constant 0 : index
    %6 = vector.load %arg4[%c0_4, %c0_5] : memref<1x32xf32, #tpu.memory_space<vmem>>, vector<1x32xf32>
    %7 = vector.broadcast %6 : vector<1x32xf32> to vector<16x32xf32>
    %8 = arith.addf %5, %7 : vector<16x32xf32>
    %c0_6 = arith.constant 0 : index
    %c0_7 = arith.constant 0 : index
    %9 = vector.load %arg5[%c0_6, %c0_7] : memref<16x32xf32, #tpu.memory_space<vmem>>, vector<16x32xf32>
    tpu.vector_store %arg5[%c0_6, %c0_7], %8 {strides = array<i32>} : memref<16x32xf32, #tpu.memory_space<vmem>>, vector<16x32xf32>,
    return
  }
  func.func @transform_0(%arg0: i32, %arg1: i32) -> (i32, i32) {
    %c0_i32 = arith.constant 0 : i32
    %c0_i32_0 = arith.constant 0 : i32
    return %arg0, %c0_i32 : i32, i32
  }
  func.func @transform_1(%arg0: i32, %arg1: i32) -> (i32, i32) {
    %c0_i32 = arith.constant 0 : i32
    %c0_i32_0 = arith.constant 0 : i32
    return %c0_i32, %arg1 : i32, i32
  }
  func.func @transform_2(%arg0: i32, %arg1: i32) -> (i32, i32) {
    %c0_i32 = arith.constant 0 : i32
    %c0_i32_0 = arith.constant 0 : i32
    return %c0_i32, %arg1 : i32, i32
  }
  func.func @transform_3(%arg0: i32, %arg1: i32) -> (i32, i32) {
    %c0_i32 = arith.constant 0 : i32
    return %arg0, %arg1 : i32, i32
  }
}

</mosaic_0001>

<llo_original>
// kernel: tpu_custom_call.1
$region0: #{tpu_custom_call.1}
  #allocation0 [shape = 'u32[]', space=smem, size = 0x4, offset = 0x4, fixed_abs, tag = 'smem constant byte address 0x4 - core index']
  #allocation1 [shape = 'u32[144,128]{1,0:T(1,128)}', space=vmem, size = 0x12000, scoped, tag = 'internal scratch']
  #allocation2 [shape = 'bf16[16,32]{1,0:T(16,128)(2,1)}', space=vmem, size = 0x1000, scoped, tag = 'scratch operand']
  %s0 = inlined_call_operand.hbm [shape: bf16[16,32], index: 0, kind: input, shape index: {}]
  %s1 = inlined_call_operand.hbm [shape: bf16[32,32], index: 1, kind: input, shape index: {}]
  %s2 = inlined_call_operand.vmem [shape: f32[1,32], index: 2, kind: input, shape index: {}]
  %s3 = inlined_call_operand.hbm [shape: f32[16,32], index: 3, kind: output, shape index: {}]
  %s4 = sld [smem:[#allocation0]]
  $region34: #{tpu_custom_call.1} parent=0
    _
  %s6 = ssub.s32 1, %s4
  %s7 = scalar_select 0, %s6, %s4
  $region1: #{tpu_custom_call.1} parent=0
    #allocation3 [shape = 'u8[4096]{0}', space=vmem, size = 0x1000, scoped, tag = 'input window, operand 0, single buffered']
    #allocation4 [shape = 's32[1]{0}', space=sflag, size = 0x4, scoped, tag = 'scoped memory for tpu_custom_call.1']
    #allocation5 [shape = 's32[1]{0}', space=sflag, size = 0x4, scoped, tag = 'scoped memory for tpu_custom_call.1']
    #allocation6 [shape = 'u8[8192]{0}', space=vmem, size = 0x2000, scoped, tag = 'input window, operand 1, single buffered']
    #allocation7 [shape = 's32[1]{0}', space=sflag, size = 0x4, scoped, tag = 'scoped memory for tpu_custom_call.1']
    #allocation8 [shape = 'u8[8192]{0}', space=vmem, size = 0x2000, scoped, tag = 'output window, operand 0, single buffered']
    %8 = vsyncpa [#allocation4], 0
    %9 = vsyncpa [#allocation7], 0
    %10 = vsyncpa [#allocation5], 0
    // Predicated region
    $region2: #{tpu_custom_call.1} parent=1 // pred_check
      _
    $region3: #{tpu_custom_call.1} parent=1 // pred_check_branch
      %12 = sbr.rel (0) target = $region5
    $region4: #{tpu_custom_call.1} parent=1 // pred_region
      %s14 = ssub.s32 128, 128
      %15 = vsyncadd [#allocation4], %s14
      %s16 = sshll.u32 [#allocation3], 4
      %s17 = int_to_ptr.vmem [resolvable:$true] %s16
      %22 = dma.hbm_to_vmem [thread:$0]  %s0, 128, %s17, [#allocation4], 64, 64, 4
    $region5: #{tpu_custom_call.1} parent=1 // pred_fallthru
      _
    // Predicated region
    $region6: #{tpu_custom_call.1} parent=1 // pred_check
      _
    $region7: #{tpu_custom_call.1} parent=1 // pred_check_branch
      %24 = sbr.rel (0) target = $region9
    $region8: #{tpu_custom_call.1} parent=1 // pred_region
      %s26 = ssub.s32 256, 256
      %27 = vsyncadd [#allocation7], %s26
      %s28 = sshll.u32 [#allocation6], 4
      %s29 = int_to_ptr.vmem [resolvable:$true] %s28
      %34 = dma.hbm_to_vmem [thread:$0]  %s1, 256, %s29, [#allocation7], 64, 64, 4
    $region9: #{tpu_custom_call.1} parent=1 // pred_fallthru
      _
    // Predicated region
    $region10: #{tpu_custom_call.1} parent=1 // pred_check
      _
    $region11: #{tpu_custom_call.1} parent=1 // pred_check_branch
      %36 = sbr.rel (0) target = $region13
    $region12: #{tpu_custom_call.1} parent=1 // pred_region
      _
    $region13: #{tpu_custom_call.1} parent=1 // pred_fallthru
      _
    // Predicated region
    $region14: #{tpu_custom_call.1} parent=1 // pred_check
      _
    $region15: #{tpu_custom_call.1} parent=1 // pred_check_branch
      %38 = sbr.rel (0) target = $region17
    $region16: #{tpu_custom_call.1} parent=1 // pred_region
      %39 = dma.done [#allocation4], 128
    $region17: #{tpu_custom_call.1} parent=1 // pred_fallthru
      _
    // Predicated region
    $region18: #{tpu_custom_call.1} parent=1 // pred_check
      _
    $region19: #{tpu_custom_call.1} parent=1 // pred_check_branch
      %41 = sbr.rel (0) target = $region21
    $region20: #{tpu_custom_call.1} parent=1 // pred_region
      %42 = dma.done [#allocation7], 256
    $region21: #{tpu_custom_call.1} parent=1 // pred_fallthru
      _
    %p44 = scmp.eq.s32.totalorder 0, 0
    // Predicated region
    $region22: #{tpu_custom_call.1} parent=1 // pred_check
      %p45 = pneg %p44
    $region23: #{tpu_custom_call.1} parent=1 // pred_check_branch
      %47 = sbr.rel (%p45) target = $region25
    $region24: #{tpu_custom_call.1} parent=1 // pred_region
      %v48 = vld [vmem:[#allocation3] sm:$0xf]
      %v49 = vld [vmem:[#allocation3 + $0x4] sm:$0xf]
      %v50 = vunpack.c.l.bf16 %v48
      %v51 = vunpack.c.l.bf16 %v49
      %v52 = vxor.u32 %v50, 2147483648
      %v53 = vxor.u32 %v51, 2147483648
      %v54 = vmul.f32 %v52, 1.442695
      %v55 = vpow.pop %v54
      %v56 = vmul.f32 %v53, 1.442695
      %v57 = vpow.pop %v56
      %v58 = vadd.f32 %v55, 1.0
      %v59 = vadd.f32 %v57, 1.0
      %v60 = vrcp.pop %v58
      %v61 = vmul.f32 1.0, %v60
      %v62 = vrcp.pop %v59
      %v63 = vmul.f32 1.0, %v62
      %v64 = vmul.f32 %v50, %v61
      %v65 = vmul.f32 %v51, %v63
      %v66 = vmul.f32 %v64, %v50
      %v67 = vmul.f32 %v65, %v51
      %v68 = vpack.c.bf16 %v67, %v66
      %vm69 = vcmask 261120
      %70 = vst.msk [vmem:[#allocation2] sm:$0xff] %vm69, %v68
    $region25: #{tpu_custom_call.1} parent=1 // pred_fallthru
      _
    %v71 = vld [vmem:[#allocation2] sm:$0xff]
    %v72 = vld [vmem:[#allocation6] sm:$0xf]
    %v73 = vld [vmem:[#allocation6 + $0x4] sm:$0xf]
    %v74 = vld [vmem:[#allocation6 + $0x8] sm:$0xf]
    %v75 = vld [vmem:[#allocation6 + $0xc] sm:$0xf]
    %v76 = vld [vmem:[%s2] sm:$0x1]
    %v78 = vlaneseq
    %v79 = vshrl.u32 %v78, 7
    %v80 = vsub.s32 0, %v79
    %v81 = vrot.slane %v76, %v80
    %v87 = vunpack.c.l.b16 %v72
    %v88 = vunpack.c.l.b16 %v73
    %v89 = vunpack.c.l.b16 %v74
    %v90 = vunpack.c.l.b16 %v75
    %v91 = vpack.c.b16 %v88, %v87
    %v92 = vpack.c.b16 %v90, %v89
    %vm95 = vcmask 261120
    %v97 = vsel %vm95, %v71, 0
    %99 = vmatprep.subr.bf16.mxu0 0
    %100 = vmatpush1.bf16.msra.mxu0 %v91
    %101 = vmatprep.subr.bf16.mxu0 0
    %102 = vmatpush1.bf16.msra.mxu0 %v92
    %103 = vmatprep.subr.bf16.mxu0 0
    %104 = vmatpush1.bf16.msra.mxu0 0
    %105 = vmatprep.subr.bf16.mxu0 0
    %106 = vmatpush1.bf16.msra.mxu0 0
    %107 = vmatprep.subr.bf16.mxu0 0
    %108 = vmatpush1.bf16.msra.mxu0 0
    %109 = vmatprep.subr.bf16.mxu0 0
    %110 = vmatpush1.bf16.msra.mxu0 0
    %111 = vmatprep.subr.bf16.mxu0 0
    %112 = vmatpush1.bf16.msra.mxu0 0
    %113 = vmatprep.subr.bf16.mxu0 0
    %114 = vmatpush1.bf16.msra.mxu0 0
    %115 = vmatprep.subr.bf16.mxu0 0
    %116 = vmatpush1.bf16.msra.mxu0 0
    %117 = vmatprep.subr.bf16.mxu0 0
    %118 = vmatpush1.bf16.msra.mxu0 0
    %119 = vmatprep.subr.bf16.mxu0 0
    %120 = vmatpush1.bf16.msra.mxu0 0
    %121 = vmatprep.subr.bf16.mxu0 0
    %122 = vmatpush1.bf16.msra.mxu0 0
    %123 = vmatprep.subr.bf16.mxu0 0
    %124 = vmatpush1.bf16.msra.mxu0 0
    %125 = vmatprep.subr.bf16.mxu0 0
    %126 = vmatpush1.bf16.msra.mxu0 0
    %127 = vmatprep.subr.bf16.mxu0 0
    %128 = vmatpush1.bf16.msra.mxu0 0
    %129 = vmatprep.subr.bf16.mxu0 0
    %130 = vmatpush1.bf16.msra.mxu0 0
    %131 = vmatprep.mubr.bf16.mxu0 0
    %132 = vmatmul.mubr.bf16.gmra.mrb[0].mxu0 %v97
    %v133 = vpop.f32.mrb[0].mxu0
    %v134 = vadd.f32 %v81, %v133
    %v135 = vpop.f32.mrb[0].mxu0
    %v136 = vpop.f32.mrb[0].mxu0
    %v137 = vadd.f32 %v81, %v136
    %v138 = vpop.f32.mrb[0].mxu0
    %139 = vdwg.mxu0
    %140 = vst.msk [vmem:[#allocation8] sm:$0xff] %vm95, %v134
    %141 = vst.msk [vmem:[#allocation8 + $0x8] sm:$0xff] %vm95, %v137
    // Predicated region
    $region26: #{tpu_custom_call.1} parent=1 // pred_check
      _
    $region27: #{tpu_custom_call.1} parent=1 // pred_check_branch
      %143 = sbr.rel (0) target = $region29
    $region28: #{tpu_custom_call.1} parent=1 // pred_region
      %s145 = ssub.s32 256, 256
      %146 = vsyncadd [#allocation5], %s145
      %s147 = sshll.u32 [#allocation8], 4
      %s148 = int_to_ptr.vmem [resolvable:$true] %s147
      %153 = dma.vmem_to_hbm [thread:$0]  %s148, 256, %s3, [#allocation5], 128, 128, 8
    $region29: #{tpu_custom_call.1} parent=1 // pred_fallthru
      _
    // Predicated region
    $region30: #{tpu_custom_call.1} parent=1 // pred_check
      _
    $region31: #{tpu_custom_call.1} parent=1 // pred_check_branch
      %155 = sbr.rel (0) target = $region33
    $region32: #{tpu_custom_call.1} parent=1 // pred_region
      %156 = dma.done [#allocation5], 256
    $region33: #{tpu_custom_call.1} parent=1 // pred_fallthru
      _
    %157 = vsyncpa [#allocation4], 1
    %158 = vsyncpa [#allocation7], 1
    %159 = vsyncpa [#allocation5], 1

</llo_original>
